<compile_context>
chip_gen: v7x
topology: tpu7x:2x2x1
jax: 0.10.0
libtpu: 0.0.40
codegen_flags: <defaults>
</compile_context>

<pallas_src>
import jax
import jax.numpy as jnp
from jax.experimental import pallas as pl
from jax.experimental.pallas import tpu as pltpu

_MIB = 1024 * 1024


# ---------------------------------------------------------------------------
# Kernels
# ---------------------------------------------------------------------------
def _meta_linear_kernel(x_ref, w_ref, b_ref, o_ref, acc_ref):
    # x_ref: (tm, tk)  w_ref: (tk, tn)  b_ref: (1, tn)  o_ref: (tm, tn)
    # acc_ref: (tm, tn) f32 scratch, resident across the K grid axis.
    k = pl.program_id(2)
    prod = jnp.dot(x_ref[...], w_ref[...], preferred_element_type=jnp.float32)

    @pl.when(k == 0)
    def _first():
        acc_ref[...] = prod          # write-through: saves one acc load+store

    @pl.when(k != 0)
    def _accum():
        acc_ref[...] += prod

    @pl.when(k == pl.num_programs(2) - 1)
    def _finalize():
        out = acc_ref[...] + b_ref[...].astype(jnp.float32)
        o_ref[...] = out.astype(o_ref.dtype)


def _meta_linear_kernel_single_k(x_ref, w_ref, b_ref, o_ref):
    # Single K step: no accumulator scratch needed at all.
    acc = jnp.dot(x_ref[...], w_ref[...], preferred_element_type=jnp.float32)
    o_ref[...] = (acc + b_ref[...].astype(jnp.float32)).astype(o_ref.dtype)


# ---------------------------------------------------------------------------
# Tile planning helpers
# ---------------------------------------------------------------------------
def _round_up(v, m):
    return ((v + m - 1) // m) * m


def _sublane_multiple(dtype):
    # f32 -> 8, bf16 -> 16, int8/fp8 -> 32 (packed sublanes).
    return {4: 8, 2: 16, 1: 32}.get(jnp.dtype(dtype).itemsize, 8)


def _vmem_capacity_bytes():
    try:
        info = pltpu.get_tpu_info()
        for attr in ("vmem_capacity_bytes", "vmem_size_bytes", "vmem_bytes"):
            v = getattr(info, attr, None)
            if v:
                return int(v)
    except Exception:
        pass
    return 64 * _MIB  # conservative (v7x per-TC) if the query is unavailable


def _tile_caps():
    """(tm_cap, tn_cap, tk_cap, vmem_limit_clamp) per chip generation."""
    cap = _vmem_capacity_bytes()
    if cap >= 100 * _MIB:            # v5e / v6e: 128 MiB physical VMEM
        return 512, 2048, 1024, 96 * _MIB
    return 512, 1024, 512, 48 * _MIB  # v7x (64 MiB per TC) or unknown


def _plan_k(K, cap):
    """Pick (tk, Kp).  Prefer a 128-multiple divisor of K (no padding)."""
    if K % 128 == 0:
        t = (min(cap, K) // 128) * 128
        while t >= 128 and K % t:
            t -= 128
        if t >= 128:
            return t, K
    if K <= 128:
        return K, K                  # full-dim block, legal for any K
    tk = min((cap // 128) * 128, _round_up(K, 128))
    return tk, _round_up(K, tk)      # zero-pad K (reduction axis must be clean)


def _plan_n(N, cap):
    if N >= cap:
        return cap, N                # ragged last N block (masked stores)
    tn = _round_up(N, 128)
    return tn, tn                    # tiny pad up to lane multiple


def _plan_m(M, cap, sub):
    if M >= cap:
        return cap, M                # ragged last M block (masked stores)
    tm = _round_up(M, sub)
    return tm, tm                    # tiny pad up to sublane multiple


# ---------------------------------------------------------------------------
# Weight preparation (do ONCE per weight) + forward call
# ---------------------------------------------------------------------------
def _prepare(weight, bias, compute_dtype=None):
    """One-time layout prep: (N, K) weight -> zero-padded (Kp, Nw) = W^T,
    bias -> (1, Nw).  Hoisting this out of the per-call path removes a full
    weight-sized HBM round trip from every forward."""
    N, K = weight.shape
    tm_cap, tn_cap, tk_cap, vmem_clamp = _tile_caps()
    tk, Kp = _plan_k(K, tk_cap)
    tn, Nw = _plan_n(N, tn_cap)

    wd = jnp.dtype(compute_dtype) if compute_dtype is not None else weight.dtype
    wt = weight.T.astype(wd)                       # (K, N), contraction on sublanes
    if (Kp, Nw) != (K, N):
        wt = jnp.pad(wt, ((0, Kp - K), (0, Nw - N)))
    b2 = bias.reshape(1, N)
    if Nw != N:
        b2 = jnp.pad(b2, ((0, 0), (0, Nw - N)))

    return dict(wt=wt, b=b2, N=N, K=K, Kp=Kp, Nw=Nw, tk=tk, tn=tn,
                tm_cap=tm_cap, vmem_clamp=vmem_clamp, compute_dtype=wd)


def _apply(prep, x):
    orig_shape = x.shape
    K = orig_shape[-1]
    assert K == prep["K"], (K, prep["K"])
    out_dtype = x.dtype
    cd = prep["compute_dtype"]

    x2 = x.reshape(-1, K)
    if x2.dtype != cd:
        x2 = x2.astype(cd)
    M = x2.shape[0]

    sub = _sublane_multiple(cd)
    tm, Mp = _plan_m(M, prep["tm_cap"], sub)
    tn, tk = prep["tn"], prep["tk"]
    Kp, Nw, N = prep["Kp"], prep["Nw"], prep["N"]

    if (Mp, Kp) != (M, K):           # only K (zero) and a <sublane M sliver pad
        x2 = jnp.pad(x2, ((0, Mp - M), (0, Kp - K)))

    # Megacore: ensure the ('parallel','parallel') grid has >= 2 tiles so both
    # v7x TensorCores get work (perf-neutral on single-TC v5e/v6e).
    while pl.cdiv(Mp, tm) * pl.cdiv(Nw, tn) < 2:
        if tn > 128:
            tn = max(128, _round_up(tn // 2, 128))
        elif tm > sub:
            tm = max(sub, _round_up(tm // 2, sub))
        else:
            break

    grid = (pl.cdiv(Mp, tm), pl.cdiv(Nw, tn), Kp // tk)
    n_k = grid[2]

    wt, b2 = prep["wt"], prep["b"]
    xs, ws, bs = x2.dtype.itemsize, wt.dtype.itemsize, b2.dtype.itemsize
    osz = jnp.dtype(out_dtype).itemsize
    vmem_bytes = (2 * tm * tk * xs + 2 * tk * tn * ws + 2 * tn * bs
                  + 2 * tm * tn * osz + (tm * tn * 4 if n_k > 1 else 0))
    vmem_limit = min(prep["vmem_clamp"], max(16 * _MIB, int(1.3 * vmem_bytes)))

    cost = pl.CostEstimate(
        flops=2 * M * N * K,
        transcendentals=0,
        bytes_accessed=M * K * xs + wt.size * ws + b2.size * bs + M * N * osz,
    )

    in_specs = [
        pl.BlockSpec((tm, tk), lambda i, j, k: (i, k)),   # x tile
        pl.BlockSpec((tk, tn), lambda i, j, k: (k, j)),   # prepared W^T tile
        pl.BlockSpec((1, tn), lambda i, j, k: (0, j)),    # bias tile
    ]
    out_spec = pl.BlockSpec((tm, tn), lambda i, j, k: (i, j))

    if n_k == 1:
        kernel, scratch = _meta_linear_kernel_single_k, ()
    else:
        kernel, scratch = _meta_linear_kernel, (pltpu.VMEM((tm, tn), jnp.float32),)

    out = pl.pallas_call(
        kernel,
        out_shape=jax.ShapeDtypeStruct((Mp, Nw), out_dtype),
        grid_spec=pltpu.PrefetchScalarGridSpec(
            num_scalar_prefetch=0,
            grid=grid,
            in_specs=in_specs,
            out_specs=out_spec,
            scratch_shapes=list(scratch),
        ),
        compiler_params=pltpu.CompilerParams(
            dimension_semantics=("parallel", "parallel", "arbitrary"),
            vmem_limit_bytes=vmem_limit,
        ),
        cost_estimate=cost,
    )(x2, wt, b2)

    if (Mp, Nw) != (M, N):
        out = out[:M, :N]
    return out.reshape(*orig_shape[:-1], N)


class MetaLinearPallas:
    """Pallas analogue of MetaLinear.forward: y = x @ weight.T + bias.

    The weight is transposed / padded / (optionally) cast ONCE at construction,
    so repeated forward calls do no weight-sized HBM copies outside the kernel.
    Set compute_dtype=jnp.bfloat16 to feed the MXU bf16 (f32 accumulation and
    f32 bias add are kept; output keeps x's dtype)."""

    def __init__(self, weight, bias, compute_dtype=None):
        self._prep = _prepare(weight, bias, compute_dtype)

    def __call__(self, x):
        return _apply(self._prep, x)

    forward = __call__


def meta_linear(x, weight, bias, compute_dtype=None):
    """One-shot F.linear (re-prepares the weight each call).  Prefer
    MetaLinearPallas when the same weight is reused across calls."""
    return _apply(_prepare(weight, bias, compute_dtype), x)


# TODO(synk): MetaModule's parameter bookkeeping (named_params / update_params /
# set_param / copy) is PyTorch module-graph plumbing, not a kernel; only the
# forward pass (F.linear) is implemented here.


# ---------------------------------------------------------------------------
# Self-test
# ---------------------------------------------------------------------------
def _check(y, x, weight, bias, atol=1e-5, rtol=1e-5):
    jax.block_until_ready(y)
    y_ref = jnp.matmul(x.astype(jnp.float32), weight.T.astype(jnp.float32)) + bias
    assert y.shape == y_ref.shape, (y.shape, y_ref.shape)
    err = float(jnp.max(jnp.abs(y.astype(jnp.float32) - y_ref)))
    assert jnp.allclose(y.astype(jnp.float32), y_ref, atol=atol, rtol=rtol), err
    return y


if __name__ == "__main__":
    key = jax.random.PRNGKey(0)

    # --- Test 1: small MetaLinear demo shapes (mirrors nn.Linear(32, 16)). ---
    in_features, out_features, batch = 32, 16, 8
    k1, k2, k3, key = jax.random.split(key, 4)
    bound = 1.0 / (in_features ** 0.5)
    x = jax.random.normal(k1, (batch, in_features), dtype=jnp.float32)
    w = jax.random.uniform(k2, (out_features, in_features), jnp.float32, -bound, bound)
    b = jax.random.uniform(k3, (out_features,), jnp.float32, -bound, bound)
    _check(meta_linear(x, w, b), x, w, b)

    # --- Test 2: multi-tile / multi-K-step path with the prepared-weight class
    #     (exercises the accumulator + bias finalize + megacore tile split). ---
    B2, S2, K2, N2 = 2, 64, 2048, 256
    k1, k2, k3, key = jax.random.split(key, 4)
    bound2 = 1.0 / (K2 ** 0.5)
    x2 = jax.random.normal(k1, (B2, S2, K2), dtype=jnp.float32)
    w2 = jax.random.uniform(k2, (N2, K2), jnp.float32, -bound2, bound2)
    b2 = jax.random.uniform(k3, (N2,), jnp.float32, -bound2, bound2)
    lin2 = MetaLinearPallas(w2, b2)               # weight prepared once
    _check(lin2(x2), x2, w2, b2, atol=1e-4, rtol=1e-4)
    _check(lin2(x2), x2, w2, b2, atol=1e-4, rtol=1e-4)   # second call reuses prep

    # --- Test 3: ragged shapes (non 8/128-multiple M, N, K) — exercises the
    #     cdiv grid / minimal-padding path and the scratch-free single-K kernel. ---
    B3, S3, K3, N3 = 3, 37, 100, 75
    k1, k2, k3, key = jax.random.split(key, 4)
    bound3 = 1.0 / (K3 ** 0.5)
    x3 = jax.random.normal(k1, (B3, S3, K3), dtype=jnp.float32)
    w3 = jax.random.uniform(k2, (N3, K3), jnp.float32, -bound3, bound3)
    b3 = jax.random.uniform(k3, (N3,), jnp.float32, -bound3, bound3)
    _check(meta_linear(x3, w3, b3), x3, w3, b3, atol=1e-5, rtol=1e-5)

    # --- Test 4: bf16 MXU inputs with f32 accumulation (optional fast path). ---
    lin4 = MetaLinearPallas(w2, b2, compute_dtype=jnp.bfloat16)
    y4 = lin4(x2)
    jax.block_until_ready(y4)
    ref4 = (jnp.dot(x2.reshape(-1, K2).astype(jnp.bfloat16),
                    w2.T.astype(jnp.bfloat16),
                    preferred_element_type=jnp.float32)
            + b2).reshape(B2, S2, N2)
    assert y4.shape == ref4.shape
    assert jnp.allclose(y4.astype(jnp.float32), ref4, atol=5e-2, rtol=5e-2), float(
        jnp.max(jnp.abs(y4.astype(jnp.float32) - ref4)))

    print("KERNEL_OK")
</pallas_src>

<mosaic_0001>
module attributes {stable_mosaic.version = 11 : i64} {
  func.func @_meta_linear_kernel_single_k(%arg0: i32, %arg1: i32, %arg2: i32, %arg3: memref<8x32xf32, #tpu.memory_space<vmem>>, %arg4: memref<32x128xf32, #tpu.memory_space<vmem>>, %arg5: memref<1x128xf32, #tpu.memory_space<vmem>>, %arg6: memref<8x128xf32, #tpu.memory_space<vmem>>) attributes {dimension_semantics = [#tpu.dimension_semantics<parallel>, #tpu.dimension_semantics<parallel>, #tpu.dimension_semantics<arbitrary>], iteration_bounds = array<i64: 1, 1, 1>, scalar_prefetch = 0 : i64, scratch_operands = 0 : i64, tpu.core_type = #tpu.core_type<tc>, window_params = [{transform_indices = @transform_0, window_bounds = array<i64: 8, 32>}, {transform_indices = @transform_1, window_bounds = array<i64: 32, 128>}, {transform_indices = @transform_2, window_bounds = array<i64: 1, 128>}, {transform_indices = @transform_3, window_bounds = array<i64: 8, 128>}]} {
    %c0 = arith.constant 0 : index
    %c0_0 = arith.constant 0 : index
    %0 = vector.load %arg3[%c0, %c0_0] : memref<8x32xf32, #tpu.memory_space<vmem>>, vector<8x32xf32>
    %c0_1 = arith.constant 0 : index
    %c0_2 = arith.constant 0 : index
    %1 = vector.load %arg4[%c0_1, %c0_2] : memref<32x128xf32, #tpu.memory_space<vmem>>, vector<32x128xf32>
    %cst = arith.constant dense<0.000000e+00> : vector<8x128xf32>
    %2 = tpu.matmul %0, %1, %cst {dimension_numbers = #tpu.dot_dimension_numbers<[1], [0], [0], [1], [0, 0, 1, 1], [], []>} : vector<8x32xf32>, vector<32x128xf32>, vector<8x128xf32> -> vector<8x128xf32>
    %c0_3 = arith.constant 0 : index
    %c0_4 = arith.constant 0 : index
    %3 = vector.load %arg5[%c0_3, %c0_4] : memref<1x128xf32, #tpu.memory_space<vmem>>, vector<1x128xf32>
    %4 = vector.broadcast %3 : vector<1x128xf32> to vector<8x128xf32>
    %5 = arith.addf %2, %4 : vector<8x128xf32>
    %c0_5 = arith.constant 0 : index
    %c0_6 = arith.constant 0 : index
    %6 = vector.load %arg6[%c0_5, %c0_6] : memref<8x128xf32, #tpu.memory_space<vmem>>, vector<8x128xf32>
    tpu.vector_store %arg6[%c0_5, %c0_6], %5 {strides = array<i32>} : memref<8x128xf32, #tpu.memory_space<vmem>>, vector<8x128xf32>,
    return
  }
  func.func @transform_0(%arg0: i32, %arg1: i32, %arg2: i32) -> (i32, i32) {
    %c0_i32 = arith.constant 0 : i32
    return %arg0, %arg2 : i32, i32
  }
  func.func @transform_1(%arg0: i32, %arg1: i32, %arg2: i32) -> (i32, i32) {
    %c0_i32 = arith.constant 0 : i32
    return %arg2, %arg1 : i32, i32
  }
  func.func @transform_2(%arg0: i32, %arg1: i32, %arg2: i32) -> (i32, i32) {
    %c0_i32 = arith.constant 0 : i32
    %c0_i32_0 = arith.constant 0 : i32
    return %c0_i32, %arg1 : i32, i32
  }
  func.func @transform_3(%arg0: i32, %arg1: i32, %arg2: i32) -> (i32, i32) {
    %c0_i32 = arith.constant 0 : i32
    return %arg0, %arg1 : i32, i32
  }
}

</mosaic_0001>

<llo_original>
// kernel: tpu_custom_call.1
$region0: #{tpu_custom_call.1}
  #allocation0 [shape = 'u32[]', space=smem, size = 0x4, offset = 0x4, fixed_abs, tag = 'smem constant byte address 0x4 - core index']
  #allocation1 [shape = 'u32[144,128]{1,0:T(1,128)}', space=vmem, size = 0x12000, scoped, tag = 'internal scratch']
  %s0 = inlined_call_operand.hbm [shape: f32[8,32], index: 0, kind: input, shape index: {}]
  %s1 = inlined_call_operand.hbm [shape: f32[32,128], index: 1, kind: input, shape index: {}]
  %s2 = inlined_call_operand.vmem [shape: f32[1,128], index: 2, kind: input, shape index: {}]
  %s3 = inlined_call_operand.hbm [shape: f32[8,128], index: 3, kind: output, shape index: {}]
  %s4 = sld [smem:[#allocation0]]
  $region30: #{tpu_custom_call.1} parent=0
    _
  %s6 = ssub.s32 1, %s4
  %s7 = scalar_select 0, %s6, %s4
  $region1: #{tpu_custom_call.1} parent=0
    #allocation2 [shape = 'u8[4096]{0}', space=vmem, size = 0x1000, scoped, tag = 'input window, operand 0, single buffered']
    #allocation3 [shape = 's32[1]{0}', space=sflag, size = 0x4, scoped, tag = 'scoped memory for tpu_custom_call.1']
    #allocation4 [shape = 's32[1]{0}', space=sflag, size = 0x4, scoped, tag = 'scoped memory for tpu_custom_call.1']
    #allocation5 [shape = 'u8[16384]{0}', space=vmem, size = 0x4000, scoped, tag = 'input window, operand 1, single buffered']
    #allocation6 [shape = 's32[1]{0}', space=sflag, size = 0x4, scoped, tag = 'scoped memory for tpu_custom_call.1']
    #allocation7 [shape = 'u8[4096]{0}', space=vmem, size = 0x1000, scoped, tag = 'output window, operand 0, single buffered']
    %8 = vsyncpa [#allocation3], 0
    %9 = vsyncpa [#allocation6], 0
    %10 = vsyncpa [#allocation4], 0
    // Predicated region
    $region2: #{tpu_custom_call.1} parent=1 // pred_check
      _
    $region3: #{tpu_custom_call.1} parent=1 // pred_check_branch
      %12 = sbr.rel (0) target = $region5
    $region4: #{tpu_custom_call.1} parent=1 // pred_region
      %s14 = ssub.s32 128, 128
      %15 = vsyncadd [#allocation3], %s14
      %s17 = sshll.u32 [#allocation2], 4
      %s18 = int_to_ptr.vmem [resolvable:$true] %s17
      %20 = dma.hbm_to_vmem [thread:$0]  %s0, 128, %s18, [#allocation3]
    $region5: #{tpu_custom_call.1} parent=1 // pred_fallthru
      _
    // Predicated region
    $region6: #{tpu_custom_call.1} parent=1 // pred_check
      _
    $region7: #{tpu_custom_call.1} parent=1 // pred_check_branch
      %22 = sbr.rel (0) target = $region9
    $region8: #{tpu_custom_call.1} parent=1 // pred_region
      %s24 = ssub.s32 512, 512
      %25 = vsyncadd [#allocation6], %s24
      %s26 = sshll.u32 [#allocation5], 4
      %s27 = int_to_ptr.vmem [resolvable:$true] %s26
      %32 = dma.hbm_to_vmem [thread:$0]  %s1, 512, %s27, [#allocation6], 128, 128, 8
    $region9: #{tpu_custom_call.1} parent=1 // pred_fallthru
      _
    // Predicated region
    $region10: #{tpu_custom_call.1} parent=1 // pred_check
      _
    $region11: #{tpu_custom_call.1} parent=1 // pred_check_branch
      %34 = sbr.rel (0) target = $region13
    $region12: #{tpu_custom_call.1} parent=1 // pred_region
      _
    $region13: #{tpu_custom_call.1} parent=1 // pred_fallthru
      _
    // Predicated region
    $region14: #{tpu_custom_call.1} parent=1 // pred_check
      _
    $region15: #{tpu_custom_call.1} parent=1 // pred_check_branch
      %36 = sbr.rel (0) target = $region17
    $region16: #{tpu_custom_call.1} parent=1 // pred_region
      %37 = dma.done [#allocation3], 128
    $region17: #{tpu_custom_call.1} parent=1 // pred_fallthru
      _
    // Predicated region
    $region18: #{tpu_custom_call.1} parent=1 // pred_check
      _
    $region19: #{tpu_custom_call.1} parent=1 // pred_check_branch
      %39 = sbr.rel (0) target = $region21
    $region20: #{tpu_custom_call.1} parent=1 // pred_region
      %40 = dma.done [#allocation6], 512
    $region21: #{tpu_custom_call.1} parent=1 // pred_fallthru
      _
    %v41 = vld [vmem:[#allocation2] sm:$0xff]
    %v42 = vld [vmem:[#allocation5] sm:$0xff]
    %v43 = vld [vmem:[#allocation5 + $0x8] sm:$0xff]
    %v44 = vld [vmem:[#allocation5 + $0x10] sm:$0xff]
    %v45 = vld [vmem:[#allocation5 + $0x18] sm:$0xff]
    %v46 = vld [vmem:[%s2] sm:$0x1]
    %v48 = vlaneseq
    %v49 = vshrl.u32 %v48, 7
    %v50 = vsub.s32 0, %v49
    %v51 = vrot.slane %v46, %v50
    %vm53 = vcmask 261120
    %v55 = vsel %vm53, %v41, 0
    %57 = vmatprep.subr.mxu0 0.0
    %58 = vmatpush1.msra.mxu0 %v42
    %59 = vmatprep.subr.mxu0 0.0
    %60 = vmatpush1.msra.mxu0 %v43
    %61 = vmatprep.subr.mxu0 0.0
    %62 = vmatpush1.msra.mxu0 %v44
    %63 = vmatprep.subr.mxu0 0.0
    %64 = vmatpush1.msra.mxu0 %v45
    %65 = vmatprep.subr.mxu0 0.0
    %66 = vmatpush1.msra.mxu0 0.0
    %67 = vmatprep.subr.mxu0 0.0
    %68 = vmatpush1.msra.mxu0 0.0
    %69 = vmatprep.subr.mxu0 0.0
    %70 = vmatpush1.msra.mxu0 0.0
    %71 = vmatprep.subr.mxu0 0.0
    %72 = vmatpush1.msra.mxu0 0.0
    %73 = vmatprep.subr.mxu0 0.0
    %74 = vmatpush1.msra.mxu0 0.0
    %75 = vmatprep.subr.mxu0 0.0
    %76 = vmatpush1.msra.mxu0 0.0
    %77 = vmatprep.subr.mxu0 0.0
    %78 = vmatpush1.msra.mxu0 0.0
    %79 = vmatprep.subr.mxu0 0.0
    %80 = vmatpush1.msra.mxu0 0.0
    %81 = vmatprep.subr.mxu0 0.0
    %82 = vmatpush1.msra.mxu0 0.0
    %83 = vmatprep.subr.mxu0 0.0
    %84 = vmatpush1.msra.mxu0 0.0
    %85 = vmatprep.subr.mxu0 0.0
    %86 = vmatpush1.msra.mxu0 0.0
    %87 = vmatprep.subr.mxu0 0.0
    %88 = vmatpush1.msra.mxu0 0.0
    %89 = vmatprep.subr.mxu0 0.0
    %90 = vmatpush1.msra.mxu0 0.0
    %91 = vmatprep.subr.mxu0 0.0
    %92 = vmatpush1.msra.mxu0 0.0
    %93 = vmatprep.subr.mxu0 0.0
    %94 = vmatpush1.msra.mxu0 0.0
    %95 = vmatprep.subr.mxu0 0.0
    %96 = vmatpush1.msra.mxu0 0.0
    %97 = vmatprep.subr.mxu0 0.0
    %98 = vmatpush1.msra.mxu0 0.0
    %99 = vmatprep.subr.mxu0 0.0
    %100 = vmatpush1.msra.mxu0 0.0
    %101 = vmatprep.subr.mxu0 0.0
    %102 = vmatpush1.msra.mxu0 0.0
    %103 = vmatprep.subr.mxu0 0.0
    %104 = vmatpush1.msra.mxu0 0.0
    %105 = vmatprep.subr.mxu0 0.0
    %106 = vmatpush1.msra.mxu0 0.0
    %107 = vmatprep.subr.mxu0 0.0
    %108 = vmatpush1.msra.mxu0 0.0
    %109 = vmatprep.subr.mxu0 0.0
    %110 = vmatpush1.msra.mxu0 0.0
    %111 = vmatprep.subr.mxu0 0.0
    %112 = vmatpush1.msra.mxu0 0.0
    %113 = vmatprep.subr.mxu0 0.0
    %114 = vmatpush1.msra.mxu0 0.0
    %115 = vmatprep.subr.mxu0 0.0
    %116 = vmatpush1.msra.mxu0 0.0
    %117 = vmatprep.subr.mxu0 0.0
    %118 = vmatpush1.msra.mxu0 0.0
    %119 = vmatprep.subr.mxu0 0.0
    %120 = vmatpush1.msra.mxu0 0.0
    %121 = vmatprep.mubr.f32.mxu0 0.0
    %122 = vmatmul.mubr.f32.gmra.mrb[0].mxu0 %v55
    %v123 = vpop.f32.mrb[0].mxu0
    %v124 = vadd.f32 %v51, %v123
    %v125 = vpop.f32.mrb[0].mxu0
    %126 = vdwg.mxu0
    %127 = vst [vmem:[#allocation7] sm:$0xff] %v124
    // Predicated region
    $region22: #{tpu_custom_call.1} parent=1 // pred_check
      _
    $region23: #{tpu_custom_call.1} parent=1 // pred_check_branch
      %129 = sbr.rel (0) target = $region25
    $region24: #{tpu_custom_call.1} parent=1 // pred_region
      %s131 = ssub.s32 128, 128
      %132 = vsyncadd [#allocation4], %s131
      %s134 = sshll.u32 [#allocation7], 4
      %s135 = int_to_ptr.vmem [resolvable:$true] %s134
      %137 = dma.vmem_to_hbm [thread:$0]  %s135, 128, %s3, [#allocation4]
    $region25: #{tpu_custom_call.1} parent=1 // pred_fallthru
      _
    // Predicated region
    $region26: #{tpu_custom_call.1} parent=1 // pred_check
      _
    $region27: #{tpu_custom_call.1} parent=1 // pred_check_branch
      %139 = sbr.rel (0) target = $region29
    $region28: #{tpu_custom_call.1} parent=1 // pred_region
      %140 = dma.done [#allocation4], 128
    $region29: #{tpu_custom_call.1} parent=1 // pred_fallthru
      _
    %141 = vsyncpa [#allocation3], 1
    %142 = vsyncpa [#allocation6], 1
    %143 = vsyncpa [#allocation4], 1

</llo_original>
